<compile_context>
chip_gen: v7x
topology: tpu7x:2x2x1
jax: 0.10.0
libtpu: 0.0.40
codegen_flags: <defaults>
</compile_context>

<pallas_src>
import functools

import jax
import jax.numpy as jnp
from jax.experimental import pallas as pl
from jax.experimental.pallas import tpu as pltpu


def _decoder_kernel(x1_ref, x2_ref, wa_ref, wb_ref, bias_ref, out_ref, *,
                    downsample, tile_h, width, c1):
    # ---- fused MaxPool2d(2) on x1 (channels on lanes, pooling on VPU) ----
    if downsample:
        a = x1_ref[...]                                  # (2*TILE_H, W, 2*C1)
        # width pooling: lanes [0:c1] = even column, [c1:2*c1] = odd column
        a = jnp.maximum(a[..., :c1], a[..., c1:])        # (2*TILE_H, W, C1)
        # height pooling: split the leading dim (free) and max row pairs
        a = a.reshape(tile_h, 2, width, c1)
        a = jnp.maximum(a[:, 0], a[:, 1])                # (TILE_H, W, C1)
    else:
        a = x1_ref[...]                                  # (TILE_H, W, C1)

    b = x2_ref[...]                                      # (TILE_H, W, C2)

    # TODO(synk): for widths that are not a multiple of 8 the flatten below may
    # force a sublane relayout (correct, just slower); pad W upstream for such
    # shapes if they ever become hot.
    m = tile_h * width
    a2 = a.reshape(m, c1)
    b2 = b.reshape(m, b.shape[-1])

    # ---- split 1x1-conv GEMM (concat never materialized), f32 accumulation ----
    acc = jnp.dot(a2, wa_ref[...], preferred_element_type=jnp.float32)
    acc = acc + jnp.dot(b2, wb_ref[...], preferred_element_type=jnp.float32)

    # ---- folded-BN bias + ReLU epilogue in f32, cast only at the store ----
    acc = acc + bias_ref[...]                            # (1, Cout) broadcast
    acc = jnp.maximum(acc, 0.0)
    out_ref[...] = acc.reshape(tile_h, width, -1).astype(out_ref.dtype)


def _vmem_buffer_bytes(shape, itemsize):
    """Conservative VMEM footprint of one pipeline buffer (lane dim padded to
    128, sublane dim padded to the dtype's sublane tile)."""
    if len(shape) == 1:
        lead, subl, lanes = 1, 1, shape[0]
    else:
        lanes, subl = shape[-1], shape[-2]
        lead = 1
        for d in shape[:-2]:
            lead *= d
    sub_tile = 8 * max(1, 4 // max(itemsize, 1))         # 8 for f32, 16 for bf16
    lanes_p = -(-lanes // 128) * 128
    subl_p = -(-subl // sub_tile) * sub_tile
    return lead * subl_p * lanes_p * itemsize


def _pick_tile_h(h, w, c1, c2, cout, itemsize, downsample,
                 vmem_budget_bytes=24 * 1024 * 1024):
    """Largest divisor of H whose double-buffered blocks + weights fit VMEM."""
    fixed = 2 * (_vmem_buffer_bytes((c1, cout), itemsize)
                 + _vmem_buffer_bytes((c2, cout), itemsize)
                 + _vmem_buffer_bytes((1, cout), 4))
    best = 1
    for d in range(1, h + 1):
        if h % d:
            continue
        if downsample:
            x1_b = _vmem_buffer_bytes((2 * d, w, 2 * c1), itemsize)
        else:
            x1_b = _vmem_buffer_bytes((d, w, c1), itemsize)
        x2_b = _vmem_buffer_bytes((d, w, c2), itemsize)
        out_b = _vmem_buffer_bytes((d, w, cout), itemsize)
        if fixed + 2 * (x1_b + x2_b + out_b) <= vmem_budget_bytes:
            best = d
    return best


def decoder_forward(x1, x2, conv_weight, bn_gamma, bn_beta, bn_mean, bn_var,
                    *, downsample=True, eps=1e-5):
    """Pallas equivalent of decoder.forward (NCHW in / NCHW out, eval-mode BN)."""
    n, c1, h1, w1 = x1.shape
    n2, c2, h, w = x2.shape
    assert n == n2, "batch mismatch"

    if downsample:
        # MaxPool2d(2) floors odd sizes: drop the trailing row/column.
        he, we = (h1 // 2) * 2, (w1 // 2) * 2
        x1 = x1[:, :, :he, :we]
        assert he == 2 * h and we == 2 * w, "pooled x1 must match x2 spatially"
    else:
        assert (h1, w1) == (h, w), "x1 must match x2 spatially when downsample=False"

    cout, cin = conv_weight.shape[0], conv_weight.shape[1]
    assert cin == c1 + c2, "conv in_ch must equal C1 + C2"

    dtype = x2.dtype
    itemsize = x2.dtype.itemsize

    # ---- fold eval-mode BatchNorm into the conv weight + per-channel bias ----
    scale = bn_gamma / jnp.sqrt(bn_var + eps)                        # (Cout,)
    w_mat = (conv_weight.reshape(cout, cin) * scale[:, None]).T      # (Cin, Cout)
    w_mat = w_mat.astype(dtype)
    bias2d = (bn_beta - bn_mean * scale).reshape(1, cout).astype(jnp.float32)
    w_a = w_mat[:c1]       # pooled-x1 channels come first (torch.cat order)
    w_b = w_mat[c1:]

    # ---- NCHW -> NHWC (channels onto lanes).
    # TODO(synk): keep the surrounding network NHWC to eliminate these transposes.
    x2n = jnp.transpose(x2, (0, 2, 3, 1))                            # (N, H, W, C2)
    if downsample:
        # Free row-major view packing each even/odd column pair onto lanes:
        # (N, 2H, 2W, C1) -> (N, 2H, W, 2*C1)
        x1n = jnp.transpose(x1, (0, 2, 3, 1)).reshape(n, 2 * h, w, 2 * c1)
    else:
        x1n = jnp.transpose(x1, (0, 2, 3, 1))                        # (N, H, W, C1)

    tile_h = _pick_tile_h(h, w, c1, c2, cout, itemsize, downsample)
    grid = (n, h // tile_h)

    if downsample:
        x1_spec = pl.BlockSpec((None, 2 * tile_h, w, 2 * c1),
                               lambda b, i: (b, i, 0, 0))
    else:
        x1_spec = pl.BlockSpec((None, tile_h, w, c1), lambda b, i: (b, i, 0, 0))
    x2_spec = pl.BlockSpec((None, tile_h, w, c2), lambda b, i: (b, i, 0, 0))
    wa_spec = pl.BlockSpec((c1, cout), lambda b, i: (0, 0))
    wb_spec = pl.BlockSpec((c2, cout), lambda b, i: (0, 0))
    bias_spec = pl.BlockSpec((1, cout), lambda b, i: (0, 0))
    out_spec = pl.BlockSpec((None, tile_h, w, cout), lambda b, i: (b, i, 0, 0))

    kernel = functools.partial(_decoder_kernel, downsample=downsample,
                               tile_h=tile_h, width=w, c1=c1)

    out_nhwc = pl.pallas_call(
        kernel,
        out_shape=jax.ShapeDtypeStruct((n, h, w, cout), dtype),
        grid=grid,
        in_specs=[x1_spec, x2_spec, wa_spec, wb_spec, bias_spec],
        out_specs=out_spec,
        compiler_params=pltpu.CompilerParams(
            dimension_semantics=("parallel", "parallel"),
            vmem_limit_bytes=48 * 1024 * 1024,
        ),
    )(x1n, x2n, w_a, w_b, bias2d)

    # Back to NCHW (single XLA copy; no lane-padding to slice off).
    return jnp.transpose(out_nhwc, (0, 3, 1, 2))


def decoder_reference(x1, x2, conv_weight, bn_gamma, bn_beta, bn_mean, bn_var,
                      *, downsample=True, eps=1e-5):
    """Pure-JAX reference matching the PyTorch module (eval-mode BN)."""
    if downsample:
        n, c, h1, w1 = x1.shape
        he, we = (h1 // 2) * 2, (w1 // 2) * 2
        x1 = x1[:, :, :he, :we].reshape(n, c, he // 2, 2, we // 2, 2)
        x1 = jnp.max(x1, axis=(3, 5))
    x = jnp.concatenate([x1, x2], axis=1)
    cout = conv_weight.shape[0]
    y = jnp.einsum("nchw,oc->nohw", x, conv_weight.reshape(cout, -1),
                   precision=jax.lax.Precision.HIGHEST)
    scale = bn_gamma / jnp.sqrt(bn_var + eps)
    shift = bn_beta - bn_mean * scale
    y = y * scale[None, :, None, None] + shift[None, :, None, None]
    return jnp.maximum(y, 0.0)


if __name__ == "__main__":
    key = jax.random.PRNGKey(0)
    k1, k2, k3, k4, k5, k6, k7, k8 = jax.random.split(key, 8)

    # Small shapes consistent with the module: in_ch = C1 + C2, 1x1 conv.
    N, C1, C2, COUT = 2, 16, 32, 32
    H, W = 16, 16

    x1 = jax.random.normal(k1, (N, C1, 2 * H, 2 * W), jnp.float32)   # pre-pool
    x2 = jax.random.normal(k2, (N, C2, H, W), jnp.float32)
    conv_w = jax.random.normal(k3, (COUT, C1 + C2, 1, 1), jnp.float32) * 0.1
    gamma = jax.random.uniform(k4, (COUT,), jnp.float32, 0.5, 1.5)
    beta = jax.random.normal(k5, (COUT,), jnp.float32) * 0.1
    mean = jax.random.normal(k6, (COUT,), jnp.float32) * 0.1
    var = jax.random.uniform(k7, (COUT,), jnp.float32, 0.5, 1.5)

    fwd = jax.jit(decoder_forward, static_argnames=("downsample",))

    # downsample=True path (maxpool fused into the kernel)
    out = jax.block_until_ready(
        fwd(x1, x2, conv_w, gamma, beta, mean, var, downsample=True))
    ref = decoder_reference(x1, x2, conv_w, gamma, beta, mean, var,
                            downsample=True)
    assert out.shape == ref.shape == (N, COUT, H, W)
    err = float(jnp.max(jnp.abs(out - ref)))
    assert err < 2e-2, f"downsample path max abs err {err}"

    # downsample=False path
    x1b = jax.random.normal(k8, (N, C1, H, W), jnp.float32)
    out2 = jax.block_until_ready(
        fwd(x1b, x2, conv_w, gamma, beta, mean, var, downsample=False))
    ref2 = decoder_reference(x1b, x2, conv_w, gamma, beta, mean, var,
                             downsample=False)
    err2 = float(jnp.max(jnp.abs(out2 - ref2)))
    assert err2 < 2e-2, f"no-downsample path max abs err {err2}"

    print("KERNEL_OK")
</pallas_src>

<mosaic_0001>
module attributes {stable_mosaic.version = 11 : i64} {
  func.func @_decoder_kernel(%arg0: i32, %arg1: i32, %arg2: memref<1x32x16x32xf32, #tpu.memory_space<vmem>>, %arg3: memref<1x16x16x32xf32, #tpu.memory_space<vmem>>, %arg4: memref<16x32xf32, #tpu.memory_space<vmem>>, %arg5: memref<32x32xf32, #tpu.memory_space<vmem>>, %arg6: memref<1x32xf32, #tpu.memory_space<vmem>>, %arg7: memref<1x16x16x32xf32, #tpu.memory_space<vmem>>) attributes {dimension_semantics = [#tpu.dimension_semantics<parallel>, #tpu.dimension_semantics<parallel>], iteration_bounds = array<i64: 2, 1>, scalar_prefetch = 0 : i64, scratch_operands = 0 : i64, tpu.core_type = #tpu.core_type<tc>, window_params = [{transform_indices = @transform_0, window_bounds = array<i64: 1, 32, 16, 32>}, {transform_indices = @transform_1, window_bounds = array<i64: 1, 16, 16, 32>}, {pipeline_mode = #tpu.pipeline_mode<synchronous>, transform_indices = @transform_2, window_bounds = array<i64: 16, 32>}, {pipeline_mode = #tpu.pipeline_mode<synchronous>, transform_indices = @transform_3, window_bounds = array<i64: 32, 32>}, {pipeline_mode = #tpu.pipeline_mode<synchronous>, transform_indices = @transform_4, window_bounds = array<i64: 1, 32>}, {transform_indices = @transform_5, window_bounds = array<i64: 1, 16, 16, 32>}]} {
    %c0 = arith.constant 0 : index
    %c0_0 = arith.constant 0 : index
    %c0_1 = arith.constant 0 : index
    %c0_2 = arith.constant 0 : index
    %0 = vector.load %arg2[%c0, %c0_0, %c0_1, %c0_2] : memref<1x32x16x32xf32, #tpu.memory_space<vmem>>, vector<1x32x16x32xf32>
    %1 = vector.shape_cast %0 : vector<1x32x16x32xf32> to vector<32x16x32xf32>
    %2 = vector.extract_strided_slice %1 {offsets = [0, 0, 0], sizes = [32, 16, 16], strides = [1, 1, 1]} : vector<32x16x32xf32> to vector<32x16x16xf32>
    %3 = vector.extract_strided_slice %1 {offsets = [0, 0, 16], sizes = [32, 16, 16], strides = [1, 1, 1]} : vector<32x16x32xf32> to vector<32x16x16xf32>
    %4 = arith.maximumf %2, %3 : vector<32x16x16xf32>
    %5 = vector.shape_cast %4 : vector<32x16x16xf32> to vector<16x2x16x16xf32>
    %6 = vector.extract_strided_slice %5 {offsets = [0, 0, 0, 0], sizes = [16, 1, 16, 16], strides = [1, 1, 1, 1]} : vector<16x2x16x16xf32> to vector<16x1x16x16xf32>
    %7 = vector.shape_cast %6 : vector<16x1x16x16xf32> to vector<16x16x16xf32>
    %8 = vector.extract_strided_slice %5 {offsets = [0, 1, 0, 0], sizes = [16, 1, 16, 16], strides = [1, 1, 1, 1]} : vector<16x2x16x16xf32> to vector<16x1x16x16xf32>
    %9 = vector.shape_cast %8 : vector<16x1x16x16xf32> to vector<16x16x16xf32>
    %10 = arith.maximumf %7, %9 : vector<16x16x16xf32>
    %c0_3 = arith.constant 0 : index
    %c0_4 = arith.constant 0 : index
    %c0_5 = arith.constant 0 : index
    %c0_6 = arith.constant 0 : index
    %11 = vector.load %arg3[%c0_3, %c0_4, %c0_5, %c0_6] : memref<1x16x16x32xf32, #tpu.memory_space<vmem>>, vector<1x16x16x32xf32>
    %12 = vector.shape_cast %11 : vector<1x16x16x32xf32> to vector<16x16x32xf32>
    %13 = vector.shape_cast %10 : vector<16x16x16xf32> to vector<256x16xf32>
    %14 = vector.shape_cast %12 : vector<16x16x32xf32> to vector<256x32xf32>
    %c0_7 = arith.constant 0 : index
    %c0_8 = arith.constant 0 : index
    %15 = vector.load %arg4[%c0_7, %c0_8] : memref<16x32xf32, #tpu.memory_space<vmem>>, vector<16x32xf32>
    %cst = arith.constant dense<0.000000e+00> : vector<256x32xf32>
    %16 = tpu.matmul %13, %15, %cst {dimension_numbers = #tpu.dot_dimension_numbers<[1], [0], [0], [1], [0, 0, 1, 1], [], []>} : vector<256x16xf32>, vector<16x32xf32>, vector<256x32xf32> -> vector<256x32xf32>
    %c0_9 = arith.constant 0 : index
    %c0_10 = arith.constant 0 : index
    %17 = vector.load %arg5[%c0_9, %c0_10] : memref<32x32xf32, #tpu.memory_space<vmem>>, vector<32x32xf32>
    %cst_11 = arith.constant dense<0.000000e+00> : vector<256x32xf32>
    %18 = tpu.matmul %14, %17, %cst_11 {dimension_numbers = #tpu.dot_dimension_numbers<[1], [0], [0], [1], [0, 0, 1, 1], [], []>} : vector<256x32xf32>, vector<32x32xf32>, vector<256x32xf32> -> vector<256x32xf32>
    %19 = arith.addf %16, %18 : vector<256x32xf32>
    %c0_12 = arith.constant 0 : index
    %c0_13 = arith.constant 0 : index
    %20 = vector.load %arg6[%c0_12, %c0_13] : memref<1x32xf32, #tpu.memory_space<vmem>>, vector<1x32xf32>
    %21 = vector.broadcast %20 : vector<1x32xf32> to vector<256x32xf32>
    %22 = arith.addf %19, %21 : vector<256x32xf32>
    %cst_14 = arith.constant 0.000000e+00 : f32
    %23 = vector.broadcast %cst_14 : f32 to vector<256x32xf32>
    %24 = arith.maximumf %22, %23 : vector<256x32xf32>
    %25 = vector.shape_cast %24 : vector<256x32xf32> to vector<16x16x32xf32>
    %c0_15 = arith.constant 0 : index
    %c0_16 = arith.constant 0 : index
    %c0_17 = arith.constant 0 : index
    %c0_18 = arith.constant 0 : index
    %26 = vector.load %arg7[%c0_15, %c0_16, %c0_17, %c0_18] : memref<1x16x16x32xf32, #tpu.memory_space<vmem>>, vector<1x16x16x32xf32>
    %27 = vector.shape_cast %26 : vector<1x16x16x32xf32> to vector<16x16x32xf32>
    %28 = vector.shape_cast %25 : vector<16x16x32xf32> to vector<1x16x16x32xf32>
    tpu.vector_store %arg7[%c0_15, %c0_16, %c0_17, %c0_18], %28 {strides = array<i32>} : memref<1x16x16x32xf32, #tpu.memory_space<vmem>>, vector<1x16x16x32xf32>,
    return
  }
  func.func @transform_0(%arg0: i32, %arg1: i32) -> (i32, i32, i32, i32) {
    %c0_i32 = arith.constant 0 : i32
    %c0_i32_0 = arith.constant 0 : i32
    %c0_i32_1 = arith.constant 0 : i32
    return %arg0, %arg1, %c0_i32, %c0_i32_0 : i32, i32, i32, i32
  }
  func.func @transform_1(%arg0: i32, %arg1: i32) -> (i32, i32, i32, i32) {
    %c0_i32 = arith.constant 0 : i32
    %c0_i32_0 = arith.constant 0 : i32
    %c0_i32_1 = arith.constant 0 : i32
    return %arg0, %arg1, %c0_i32, %c0_i32_0 : i32, i32, i32, i32
  }
  func.func @transform_2(%arg0: i32, %arg1: i32) -> (i32, i32) {
    %c0_i32 = arith.constant 0 : i32
    %c0_i32_0 = arith.constant 0 : i32
    %c0_i32_1 = arith.constant 0 : i32
    return %c0_i32, %c0_i32_0 : i32, i32
  }
  func.func @transform_3(%arg0: i32, %arg1: i32) -> (i32, i32) {
    %c0_i32 = arith.constant 0 : i32
    %c0_i32_0 = arith.constant 0 : i32
    %c0_i32_1 = arith.constant 0 : i32
    return %c0_i32, %c0_i32_0 : i32, i32
  }
  func.func @transform_4(%arg0: i32, %arg1: i32) -> (i32, i32) {
    %c0_i32 = arith.constant 0 : i32
    %c0_i32_0 = arith.constant 0 : i32
    %c0_i32_1 = arith.constant 0 : i32
    return %c0_i32, %c0_i32_0 : i32, i32
  }
  func.func @transform_5(%arg0: i32, %arg1: i32) -> (i32, i32, i32, i32) {
    %c0_i32 = arith.constant 0 : i32
    %c0_i32_0 = arith.constant 0 : i32
    %c0_i32_1 = arith.constant 0 : i32
    return %arg0, %arg1, %c0_i32, %c0_i32_0 : i32, i32, i32, i32
  }
}

</mosaic_0001>

<llo_original>
// kernel: decoder_forward.1
$region0: #{decoder_forward.1}
  #allocation0 [shape = 'u32[]', space=smem, size = 0x4, offset = 0x4, fixed_abs, tag = 'smem constant byte address 0x4 - core index']
  #allocation1 [shape = 'u32[144,128]{1,0:T(1,128)}', space=vmem, size = 0x12000, scoped, tag = 'internal scratch']
  %s0 = inlined_call_operand.vmem [shape: f32[2,32,16,32], index: 0, kind: input, shape index: {}]
  %s1 = inlined_call_operand.vmem [shape: f32[2,16,16,32], index: 1, kind: input, shape index: {}]
  %s2 = inlined_call_operand.vmem [shape: f32[16,32], index: 2, kind: input, shape index: {}]
  %s3 = inlined_call_operand.vmem [shape: f32[32,32], index: 3, kind: input, shape index: {}]
  %s4 = inlined_call_operand.vmem [shape: f32[1,32], index: 4, kind: input, shape index: {}]
  %s5 = inlined_call_operand.hbm [shape: f32[2,16,16,32], index: 5, kind: output, shape index: {}]
  %s6 = sld [smem:[#allocation0]]
  $region53: #{decoder_forward.1} parent=0
    _
  %s8 = ssub.s32 1, %s6
  %s9 = scalar_select 0, %s8, %s6
  $region1: #{decoder_forward.1} parent=0
    #allocation2 [shape = 'u8[262144]{0}', space=vmem, size = 0x40000, scoped, tag = 'output window, operand 0']
    #allocation3 [shape = 's32[2]{0}', space=sflag, size = 0x8, scoped, tag = 'scoped memory for decoder_forward.1']
    %10 = vsyncpa [#allocation3], 0
    %s11 = scalar_lea.sflag [#allocation3], 1
    %12 = vsyncpa %s11, 0
    loop: start=0, step=1, limit=4
    $region2: #{decoder_forward.1} parent=1 // loop_pre_header
      _
    $region3: #{decoder_forward.1} parent=1 // loop_header
      %s14 = sphi 0, %s18
      %p15 = scmp.ge.s32.totalorder %s14, 4
      %s21 = sphi 0, %s33
      %s22 = sphi 0, %s29
      %s23 = sphi 0, %s21
      %s24 = sphi 0, %s22
      %s25 = sphi 0, %s23
      %s26 = sphi 0, %s24
      %s38 = sphi 0, %s40
      %s41 = sphi 0, %s38
      %s42 = sphi 0, %s41
      %s58 = sphi 0, %s42
      %s66 = sphi 0, %s68
      %s69 = sphi 0, %s66
      %s70 = sphi 0, %s69
      %s86 = sphi 0, %s70
      %s90 = sphi 0, %s90
      %s92 = sphi 0, %s90
      %s93 = sphi 0, %s92
      %s107 = sphi 0, %s93
      %s111 = sphi 0, %s111
      %s113 = sphi 0, %s111
      %s114 = sphi 0, %s113
      %s128 = sphi 0, %s114
      %s132 = sphi 0, %s132
      %s134 = sphi 0, %s132
      %s135 = sphi 0, %s134
      %s149 = sphi 0, %s135
      %s157 = sphi 0, %s159
      %s160 = sphi 0, %s157
      %s161 = sphi 0, %s160
      %s177 = sphi 0, %s161
    $region4: #{decoder_forward.1} parent=1 // loop_header_branch
      %17 = sbr.rel (%p15) target = $region8
    $region5: #{decoder_forward.1} parent=1 // loop_body
      %s19 = ssub.s32 %s14, 1
      %s20 = ssub.s32 %s14, 2
      %s27 = sadd.s32 1, %s22
      %p28 = scmp.ge.s32.totalorder %s27, 1
      %s29 = scalar_select %p28, 0, %s27
      %s30 = sadd.s32 1, %s21
      %s31 = scalar_select %p28, %s30, %s21
      %p32 = scmp.ge.s32.totalorder %s31, 2
      %s33 = scalar_select %p32, 0, %s31
      %s34 = ssub.s32 %s21, %s33
      %s35 = ssub.s32 %s22, %s29
      %s36 = sor.u32 %s34, %s35
      %p37 = scmp.eq.s32.totalorder %s36, 0
      %s39 = sadd.s32 %s38, 1
      %s40 = scalar_select %p37, %s38, %s39
      %p43 = pneg %p37
      %p44 = scmp.eq.s32.totalorder %s14, 1
      %p45 = por %p43, %p44
      %p46 = scmp.ne.s32.totalorder %s38, %s41
      %p47 = scmp.eq.s32.totalorder %s14, 0
      %p48 = por %p46, %p47
      %p49 = scmp.ne.s32.totalorder %s38, %s41
      %p50 = scmp.eq.s32.totalorder %s19, 1
      %p51 = por %p49, %p50
      %p52 = scmp.ne.s32.totalorder %s41, %s42
      %p53 = scmp.eq.s32.totalorder %s19, 0
      %p54 = por %p52, %p53
      %p55 = scmp.ne.s32.totalorder %s41, %s42
      %p56 = scmp.eq.s32.totalorder %s20, 1
      %p57 = por %p55, %p56
      %p59 = scmp.ne.s32.totalorder %s42, %s58
      %p60 = scmp.eq.s32.totalorder %s20, 0
      %p61 = por %p59, %p60
      %s62 = ssub.s32 %s21, %s33
      %s63 = ssub.s32 %s22, %s29
      %s64 = sor.u32 %s62, %s63
      %p65 = scmp.eq.s32.totalorder %s64, 0
      %s67 = sadd.s32 %s66, 1
      %s68 = scalar_select %p65, %s66, %s67
      %p71 = pneg %p65
      %p72 = scmp.eq.s32.totalorder %s14, 1
      %p73 = por %p71, %p72
      %p74 = scmp.ne.s32.totalorder %s66, %s69
      %p75 = scmp.eq.s32.totalorder %s14, 0
      %p76 = por %p74, %p75
      %p77 = scmp.ne.s32.totalorder %s66, %s69
      %p78 = scmp.eq.s32.totalorder %s19, 1
      %p79 = por %p77, %p78
      %p80 = scmp.ne.s32.totalorder %s69, %s70
      %p81 = scmp.eq.s32.totalorder %s19, 0
      %p82 = por %p80, %p81
      %p83 = scmp.ne.s32.totalorder %s69, %s70
      %p84 = scmp.eq.s32.totalorder %s20, 1
      %p85 = por %p83, %p84
      %p87 = scmp.ne.s32.totalorder %s70, %s86
      %p88 = scmp.eq.s32.totalorder %s20, 0
      %p89 = por %p87, %p88
      %s91 = sadd.s32 %s90, 1
      %p94 = scmp.eq.s32.totalorder %s14, 1
      %p95 = scmp.ne.s32.totalorder %s90, %s92
      %p96 = scmp.eq.s32.totalorder %s14, 0
      %p97 = por %p95, %p96
      %p98 = scmp.ne.s32.totalorder %s90, %s92
      %p99 = scmp.eq.s32.totalorder %s19, 1
      %p100 = por %p98, %p99
      %p101 = scmp.ne.s32.totalorder %s92, %s93
      %p102 = scmp.eq.s32.totalorder %s19, 0
      %p103 = por %p101, %p102
      %p104 = scmp.ne.s32.totalorder %s92, %s93
      %p105 = scmp.eq.s32.totalorder %s20, 1
      %p106 = por %p104, %p105
      %p108 = scmp.ne.s32.totalorder %s93, %s107
      %p109 = scmp.eq.s32.totalorder %s20, 0
      %p110 = por %p108, %p109
      %s112 = sadd.s32 %s111, 1
      %p115 = scmp.eq.s32.totalorder %s14, 1
      %p116 = scmp.ne.s32.totalorder %s111, %s113
      %p117 = scmp.eq.s32.totalorder %s14, 0
      %p118 = por %p116, %p117
      %p119 = scmp.ne.s32.totalorder %s111, %s113
      %p120 = scmp.eq.s32.totalorder %s19, 1
      %p121 = por %p119, %p120
      %p122 = scmp.ne.s32.totalorder %s113, %s114
      %p123 = scmp.eq.s32.totalorder %s19, 0
      %p124 = por %p122, %p123
      %p125 = scmp.ne.s32.totalorder %s113, %s114
      %p126 = scmp.eq.s32.totalorder %s20, 1
      %p127 = por %p125, %p126
      %p129 = scmp.ne.s32.totalorder %s114, %s128
      %p130 = scmp.eq.s32.totalorder %s20, 0
      %p131 = por %p129, %p130
      %s133 = sadd.s32 %s132, 1
      %p136 = scmp.eq.s32.totalorder %s14, 1
      %p137 = scmp.ne.s32.totalorder %s132, %s134
      %p138 = scmp.eq.s32.totalorder %s14, 0
      %p139 = por %p137, %p138
      %p140 = scmp.ne.s32.totalorder %s132, %s134
      %p141 = scmp.eq.s32.totalorder %s19, 1
      %p142 = por %p140, %p141
      %p143 = scmp.ne.s32.totalorder %s134, %s135
      %p144 = scmp.eq.s32.totalorder %s19, 0
      %p145 = por %p143, %p144
      %p146 = scmp.ne.s32.totalorder %s134, %s135
      %p147 = scmp.eq.s32.totalorder %s20, 1
      %p148 = por %p146, %p147
      %p150 = scmp.ne.s32.totalorder %s135, %s149
      %p151 = scmp.eq.s32.totalorder %s20, 0
      %p152 = por %p150, %p151
      %s153 = ssub.s32 %s21, %s33
      %s154 = ssub.s32 %s22, %s29
      %s155 = sor.u32 %s153, %s154
      %p156 = scmp.eq.s32.totalorder %s155, 0
      %s158 = sadd.s32 %s157, 1
      %s159 = scalar_select %p156, %s157, %s158
      %p162 = pneg %p156
      %p163 = scmp.eq.s32.totalorder %s14, 1
      %p164 = por %p162, %p163
      %p165 = scmp.ne.s32.totalorder %s157, %s160
      %p166 = scmp.eq.s32.totalorder %s14, 0
      %p167 = por %p165, %p166
      %p168 = scmp.ne.s32.totalorder %s157, %s160
      %p169 = scmp.eq.s32.totalorder %s19, 1
      %p170 = por %p168, %p169
      %p171 = scmp.ne.s32.totalorder %s160, %s161
      %p172 = scmp.eq.s32.totalorder %s19, 0
      %p173 = por %p171, %p172
      %p174 = scmp.ne.s32.totalorder %s160, %s161
      %p175 = scmp.eq.s32.totalorder %s20, 1
      %p176 = por %p174, %p175
      %p178 = scmp.ne.s32.totalorder %s161, %s177
      %p179 = scmp.eq.s32.totalorder %s20, 0
      %p180 = por %p178, %p179
      %p181 = scmp.le.s32.totalorder 1, %s14
      %p182 = scmp.lt.s32.totalorder %s14, 3
      %p183 = pnand %p181, %p182
      %p184 = pneg %p183
      // Predicated region
      $region9: #{decoder_forward.1} parent=5 // pred_check
        _
      $region10: #{decoder_forward.1} parent=5 // pred_check_branch
        %186 = sbr.rel (%p183) target = $region12
      $region11: #{decoder_forward.1} parent=5 // pred_region
        %s187 = ssub.s32 %s14, 1
        // Predicated region
        $region13: #{decoder_forward.1} parent=11 // pred_check
          %p188 = pneg %p103
        $region14: #{decoder_forward.1} parent=11 // pred_check_branch
          %190 = sbr.rel (%p188) target = $region16
        $region15: #{decoder_forward.1} parent=11 // pred_region
          _
        $region16: #{decoder_forward.1} parent=11 // pred_fallthru
          _
        // Predicated region
        $region17: #{decoder_forward.1} parent=11 // pred_check
          %p191 = pneg %p124
        $region18: #{decoder_forward.1} parent=11 // pred_check_branch
          %193 = sbr.rel (%p191) target = $region20
        $region19: #{decoder_forward.1} parent=11 // pred_region
          _
        $region20: #{decoder_forward.1} parent=11 // pred_fallthru
          _
        // Predicated region
        $region21: #{decoder_forward.1} parent=11 // pred_check
          %p194 = pneg %p145
        $region22: #{decoder_forward.1} parent=11 // pred_check_branch
          %196 = sbr.rel (%p194) target = $region24
        $region23: #{decoder_forward.1} parent=11 // pred_region
          _
        $region24: #{decoder_forward.1} parent=11 // pred_fallthru
          _
      $region12: #{decoder_forward.1} parent=5 // pred_fallthru
        _
      %p197 = scmp.lt.s32.totalorder %s14, 2
      // Predicated region
      $region25: #{decoder_forward.1} parent=5 // pred_check
        %p198 = pneg %p197
      $region26: #{decoder_forward.1} parent=5 // pred_check_branch
        %200 = sbr.rel (%p198) target = $region28
      $region27: #{decoder_forward.1} parent=5 // pred_region
        // Predicated region
        $region29: #{decoder_forward.1} parent=27 // pred_check
          %p201 = pneg %p48
        $region30: #{decoder_forward.1} parent=27 // pred_check_branch
          %203 = sbr.rel (%p201) target = $region32
        $region31: #{decoder_forward.1} parent=27 // pred_region
          %s204 = smul.u32 32, %s22
          %p205 = scmp.lt.s32.totalorder %s21, 1
          %s206 = scalar_select %p205, %s21, 1
          %p207 = scmp.lt.s32.totalorder %s204, 31
          %s208 = scalar_select %p207, %s204, 31
          %s209 = smul.addr %s208, 2
          %s210 = smul.addr %s206, 64
          %s211 = sadd.s32 %s209, %s210
          %s212 = smul.addr %s211, 8
          %s213 = scalar_lea.vmem %s0, %s212
          %s214 = smul.u32 32, %s22
        $region32: #{decoder_forward.1} parent=27 // pred_fallthru
          _
        // Predicated region
        $region33: #{decoder_forward.1} parent=27 // pred_check
          %p215 = pneg %p76
        $region34: #{decoder_forward.1} parent=27 // pred_check_branch
          %217 = sbr.rel (%p215) target = $region36
        $region35: #{decoder_forward.1} parent=27 // pred_region
          %s218 = smul.u32 16, %s22
          %p219 = scmp.lt.s32.totalorder %s21, 1
          %s220 = scalar_select %p219, %s21, 1
          %p221 = scmp.lt.s32.totalorder %s218, 15
          %s222 = scalar_select %p221, %s218, 15
          %s223 = smul.addr %s222, 2
          %s224 = smul.addr %s220, 32
          %s225 = sadd.s32 %s223, %s224
          %s226 = smul.addr %s225, 8
          %s227 = scalar_lea.vmem %s1, %s226
          %s228 = smul.u32 16, %s22
        $region36: #{decoder_forward.1} parent=27 // pred_fallthru
          _
      $region28: #{decoder_forward.1} parent=5 // pred_fallthru
        _
      %p229 = scmp.le.s32.totalorder 1, %s14
      %p230 = scmp.lt.s32.totalorder %s14, 3
      %p231 = pnand %p229, %p230
      %p232 = pneg %p231
      // Predicated region
      $region37: #{decoder_forward.1} parent=5 // pred_check
        _
      $region38: #{decoder_forward.1} parent=5 // pred_check_branch
        %234 = sbr.rel (%p231) target = $region40
      $region39: #{decoder_forward.1} parent=5 // pred_region
        %s235 = ssub.s32 %s14, 1
        %s236 = smul.u32 32, %s24
        %p237 = scmp.lt.s32.totalorder %s23, 1
        %s238 = scalar_select %p237, %s23, 1
        %p239 = scmp.lt.s32.totalorder %s236, 31
        %s240 = scalar_select %p239, %s236, 31
        %s241 = smul.addr %s240, 2
        %s242 = smul.addr %s238, 64
        %s243 = sadd.s32 %s241, %s242
        %s244 = smul.addr %s243, 8
        %s245 = scalar_lea.vmem %s0, %s244
        %p246 = pneg %p54
        %p247 = pneg %p51
        %s248 = smul.u32 16, %s24
        %p249 = scmp.lt.s32.totalorder %s23, 1
        %s250 = scalar_select %p249, %s23, 1
        %p251 = scmp.lt.s32.totalorder %s248, 15
        %s252 = scalar_select %p251, %s248, 15
        %s253 = smul.addr %s252, 2
        %s254 = smul.addr %s250, 32
        %s255 = sadd.s32 %s253, %s254
        %s256 = smul.addr %s255, 8
        %s257 = scalar_lea.vmem %s1, %s256
        %p258 = pneg %p82
        %p259 = pneg %p79
        %p260 = pneg %p103
        %p261 = pneg %p100
        %p262 = pneg %p124
        %p263 = pneg %p121
        %p264 = pneg %p145
        %p265 = pneg %p142
        %p266 = pneg %p173
        %p267 = pneg %p170
        %s268 = sand.u32 %s160, 1
        %s269 = scalar_lea.sflag [#allocation3], %s268
        %s270 = sand.u32 %s160, 1
        %s271 = smul.addr %s270, 256
        %s272 = scalar_lea.vmem [#allocation2], %s271
        %s273 = smul.u32 32, %s24
        %p274 = scmp.lt.s32.totalorder %s23, 1
        %s275 = scalar_select %p274, %s23, 1
        %p276 = scmp.lt.s32.totalorder %s273, 31
        %s277 = scalar_select %p276, %s273, 31
        %s278 = smul.addr %s277, 2
        %s279 = smul.addr %s275, 64
        %s280 = sadd.s32 %s278, %s279
        %s281 = smul.addr %s280, 8
        %s282 = scalar_lea.vmem %s0, %s281
        %s283 = smul.u32 32, %s24
        %s284 = smul.u32 16, %s24
        %p285 = scmp.lt.s32.totalorder %s23, 1
        %s286 = scalar_select %p285, %s23, 1
        %p287 = scmp.lt.s32.totalorder %s284, 15
        %s288 = scalar_select %p287, %s284, 15
        %s289 = smul.addr %s288, 2
        %s290 = smul.addr %s286, 32
        %s291 = sadd.s32 %s289, %s290
        %s292 = smul.addr %s291, 8
        %s293 = scalar_lea.vmem %s1, %s292
        %s294 = smul.u32 16, %s24
        %s295 = smul.u32 16, %s24
        %v296 = vld [vmem:[%s282] sm:$0xff]
        %v297 = vld [vmem:[%s282 + $0x8] sm:$0xff]
        %v298 = vld [vmem:[%s282 + $0x10] sm:$0xff]
        %v299 = vld [vmem:[%s282 + $0x18] sm:$0xff]
        %v300 = vld [vmem:[%s282 + $0x20] sm:$0xff]
        %v301 = vld [vmem:[%s282 + $0x28] sm:$0xff]
        %v302 = vld [vmem:[%s282 + $0x30] sm:$0xff]
        %v303 = vld [vmem:[%s282 + $0x38] sm:$0xff]
        %v304 = vld [vmem:[%s282 + $0x40] sm:$0xff]
        %v305 = vld [vmem:[%s282 + $0x48] sm:$0xff]
        %v306 = vld [vmem:[%s282 + $0x50] sm:$0xff]
        %v307 = vld [vmem:[%s282 + $0x58] sm:$0xff]
        %v308 = vld [vmem:[%s282 + $0x60] sm:$0xff]
        %v309 = vld [vmem:[%s282 + $0x68] sm:$0xff]
        %v310 = vld [vmem:[%s282 + $0x70] sm:$0xff]
        %v311 = vld [vmem:[%s282 + $0x78] sm:$0xff]
        %v312 = vld [vmem:[%s282 + $0x80] sm:$0xff]
        %v313 = vld [vmem:[%s282 + $0x88] sm:$0xff]
        %v314 = vld [vmem:[%s282 + $0x90] sm:$0xff]
        %v315 = vld [vmem:[%s282 + $0x98] sm:$0xff]
        %v316 = vld [vmem:[%s282 + $0xa0] sm:$0xff]
        %v317 = vld [vmem:[%s282 + $0xa8] sm:$0xff]
        %v318 = vld [vmem:[%s282 + $0xb0] sm:$0xff]
        %v319 = vld [vmem:[%s282 + $0xb8] sm:$0xff]
        %v320 = vld [vmem:[%s282 + $0xc0] sm:$0xff]
        %v321 = vld [vmem:[%s282 + $0xc8] sm:$0xff]
        %v322 = vld [vmem:[%s282 + $0xd0] sm:$0xff]
        %v323 = vld [vmem:[%s282 + $0xd8] sm:$0xff]
        %v324 = vld [vmem:[%s282 + $0xe0] sm:$0xff]
        %v325 = vld [vmem:[%s282 + $0xe8] sm:$0xff]
        %v326 = vld [vmem:[%s282 + $0xf0] sm:$0xff]
        %v327 = vld [vmem:[%s282 + $0xf8] sm:$0xff]
        %v328 = vld [vmem:[%s282 + $0x100] sm:$0xff]
        %v329 = vld [vmem:[%s282 + $0x108] sm:$0xff]
        %v330 = vld [vmem:[%s282 + $0x110] sm:$0xff]
        %v331 = vld [vmem:[%s282 + $0x118] sm:$0xff]
        %v332 = vld [vmem:[%s282 + $0x120] sm:$0xff]
        %v333 = vld [vmem:[%s282 + $0x128] sm:$0xff]
        %v334 = vld [vmem:[%s282 + $0x130] sm:$0xff]
        %v335 = vld [vmem:[%s282 + $0x138] sm:$0xff]
        %v336 = vld [vmem:[%s282 + $0x140] sm:$0xff]
        %v337 = vld [vmem:[%s282 + $0x148] sm:$0xff]
        %v338 = vld [vmem:[%s282 + $0x150] sm:$0xff]
        %v339 = vld [vmem:[%s282 + $0x158] sm:$0xff]
        %v340 = vld [vmem:[%s282 + $0x160] sm:$0xff]
        %v341 = vld [vmem:[%s282 + $0x168] sm:$0xff]
        %v342 = vld [vmem:[%s282 + $0x170] sm:$0xff]
        %v343 = vld [vmem:[%s282 + $0x178] sm:$0xff]
        %v344 = vld [vmem:[%s282 + $0x180] sm:$0xff]
        %v345 = vld [vmem:[%s282 + $0x188] sm:$0xff]
        %v346 = vld [vmem:[%s282 + $0x190] sm:$0xff]
        %v347 = vld [vmem:[%s282 + $0x198] sm:$0xff]
        %v348 = vld [vmem:[%s282 + $0x1a0] sm:$0xff]
        %v349 = vld [vmem:[%s282 + $0x1a8] sm:$0xff]
        %v350 = vld [vmem:[%s282 + $0x1b0] sm:$0xff]
        %v351 = vld [vmem:[%s282 + $0x1b8] sm:$0xff]
        %v352 = vld [vmem:[%s282 + $0x1c0] sm:$0xff]
        %v353 = vld [vmem:[%s282 + $0x1c8] sm:$0xff]
        %v354 = vld [vmem:[%s282 + $0x1d0] sm:$0xff]
        %v355 = vld [vmem:[%s282 + $0x1d8] sm:$0xff]
        %v356 = vld [vmem:[%s282 + $0x1e0] sm:$0xff]
        %v357 = vld [vmem:[%s282 + $0x1e8] sm:$0xff]
        %v358 = vld [vmem:[%s282 + $0x1f0] sm:$0xff]
        %v359 = vld [vmem:[%s282 + $0x1f8] sm:$0xff]
        %424 = vrot.lane.b32.xlu0 %v296, 112
        %v425 = vpop.permute.xlu0 %424
        %426 = vrot.lane.b32.xlu0 %v297, 112
        %v427 = vpop.permute.xlu0 %426
        %428 = vrot.lane.b32.xlu0 %v298, 112
        %v429 = vpop.permute.xlu0 %428
        %430 = vrot.lane.b32.xlu0 %v299, 112
        %v431 = vpop.permute.xlu0 %430
        %432 = vrot.lane.b32.xlu0 %v300, 112
        %v433 = vpop.permute.xlu0 %432
        %434 = vrot.lane.b32.xlu0 %v301, 112
        %v435 = vpop.permute.xlu0 %434
        %436 = vrot.lane.b32.xlu0 %v302, 112
        %v437 = vpop.permute.xlu0 %436
        %438 = vrot.lane.b32.xlu0 %v303, 112
        %v439 = vpop.permute.xlu0 %438
        %440 = vrot.lane.b32.xlu0 %v304, 112
        %v441 = vpop.permute.xlu0 %440
        %442 = vrot.lane.b32.xlu0 %v305, 112
        %v443 = vpop.permute.xlu0 %442
        %444 = vrot.lane.b32.xlu0 %v306, 112
        %v445 = vpop.permute.xlu0 %444
        %446 = vrot.lane.b32.xlu0 %v307, 112
        %v447 = vpop.permute.xlu0 %446
        %448 = vrot.lane.b32.xlu0 %v308, 112
        %v449 = vpop.permute.xlu0 %448
        %450 = vrot.lane.b32.xlu0 %v309, 112
        %v451 = vpop.permute.xlu0 %450
        %452 = vrot.lane.b32.xlu0 %v310, 112
        %v453 = vpop.permute.xlu0 %452
        %454 = vrot.lane.b32.xlu0 %v311, 112
        %v455 = vpop.permute.xlu0 %454
        %456 = vrot.lane.b32.xlu0 %v312, 112
        %v457 = vpop.permute.xlu0 %456
        %458 = vrot.lane.b32.xlu0 %v313, 112
        %v459 = vpop.permute.xlu0 %458
        %460 = vrot.lane.b32.xlu0 %v314, 112
        %v461 = vpop.permute.xlu0 %460
        %462 = vrot.lane.b32.xlu0 %v315, 112
        %v463 = vpop.permute.xlu0 %462
        %464 = vrot.lane.b32.xlu0 %v316, 112
        %v465 = vpop.permute.xlu0 %464
        %466 = vrot.lane.b32.xlu0 %v317, 112
        %v467 = vpop.permute.xlu0 %466
        %468 = vrot.lane.b32.xlu0 %v318, 112
        %v469 = vpop.permute.xlu0 %468
        %470 = vrot.lane.b32.xlu0 %v319, 112
        %v471 = vpop.permute.xlu0 %470
        %472 = vrot.lane.b32.xlu0 %v320, 112
        %v473 = vpop.permute.xlu0 %472
        %474 = vrot.lane.b32.xlu0 %v321, 112
        %v475 = vpop.permute.xlu0 %474
        %476 = vrot.lane.b32.xlu0 %v322, 112
        %v477 = vpop.permute.xlu0 %476
        %478 = vrot.lane.b32.xlu0 %v323, 112
        %v479 = vpop.permute.xlu0 %478
        %480 = vrot.lane.b32.xlu0 %v324, 112
        %v481 = vpop.permute.xlu0 %480
        %482 = vrot.lane.b32.xlu0 %v325, 112
        %v483 = vpop.permute.xlu0 %482
        %484 = vrot.lane.b32.xlu0 %v326, 112
        %v485 = vpop.permute.xlu0 %484
        %486 = vrot.lane.b32.xlu0 %v327, 112
        %v487 = vpop.permute.xlu0 %486
        %488 = vrot.lane.b32.xlu0 %v328, 112
        %v489 = vpop.permute.xlu0 %488
        %490 = vrot.lane.b32.xlu0 %v329, 112
        %v491 = vpop.permute.xlu0 %490
        %492 = vrot.lane.b32.xlu0 %v330, 112
        %v493 = vpop.permute.xlu0 %492
        %494 = vrot.lane.b32.xlu0 %v331, 112
        %v495 = vpop.permute.xlu0 %494
        %496 = vrot.lane.b32.xlu0 %v332, 112
        %v497 = vpop.permute.xlu0 %496
        %498 = vrot.lane.b32.xlu0 %v333, 112
        %v499 = vpop.permute.xlu0 %498
        %500 = vrot.lane.b32.xlu0 %v334, 112
        %v501 = vpop.permute.xlu0 %500
        %502 = vrot.lane.b32.xlu0 %v335, 112
        %v503 = vpop.permute.xlu0 %502
        %504 = vrot.lane.b32.xlu0 %v336, 112
        %v505 = vpop.permute.xlu0 %504
        %506 = vrot.lane.b32.xlu0 %v337, 112
        %v507 = vpop.permute.xlu0 %506
        %508 = vrot.lane.b32.xlu0 %v338, 112
        %v509 = vpop.permute.xlu0 %508
        %510 = vrot.lane.b32.xlu0 %v339, 112
        %v511 = vpop.permute.xlu0 %510
        %512 = vrot.lane.b32.xlu0 %v340, 112
        %v513 = vpop.permute.xlu0 %512
        %514 = vrot.lane.b32.xlu0 %v341, 112
        %v515 = vpop.permute.xlu0 %514
        %516 = vrot.lane.b32.xlu0 %v342, 112
        %v517 = vpop.permute.xlu0 %516
        %518 = vrot.lane.b32.xlu0 %v343, 112
        %v519 = vpop.permute.xlu0 %518
        %520 = vrot.lane.b32.xlu0 %v344, 112
        %v521 = vpop.permute.xlu0 %520
        %522 = vrot.lane.b32.xlu0 %v345, 112
        %v523 = vpop.permute.xlu0 %522
        %524 = vrot.lane.b32.xlu0 %v346, 112
        %v525 = vpop.permute.xlu0 %524
        %526 = vrot.lane.b32.xlu0 %v347, 112
        %v527 = vpop.permute.xlu0 %526
        %528 = vrot.lane.b32.xlu0 %v348, 112
        %v529 = vpop.permute.xlu0 %528
        %530 = vrot.lane.b32.xlu0 %v349, 112
        %v531 = vpop.permute.xlu0 %530
        %532 = vrot.lane.b32.xlu0 %v350, 112
        %v533 = vpop.permute.xlu0 %532
        %534 = vrot.lane.b32.xlu0 %v351, 112
        %v535 = vpop.permute.xlu0 %534
        %536 = vrot.lane.b32.xlu0 %v352, 112
        %v537 = vpop.permute.xlu0 %536
        %538 = vrot.lane.b32.xlu0 %v353, 112
        %v539 = vpop.permute.xlu0 %538
        %540 = vrot.lane.b32.xlu0 %v354, 112
        %v541 = vpop.permute.xlu0 %540
        %542 = vrot.lane.b32.xlu0 %v355, 112
        %v543 = vpop.permute.xlu0 %542
        %544 = vrot.lane.b32.xlu0 %v356, 112
        %v545 = vpop.permute.xlu0 %544
        %546 = vrot.lane.b32.xlu0 %v357, 112
        %v547 = vpop.permute.xlu0 %546
        %548 = vrot.lane.b32.xlu0 %v358, 112
        %v549 = vpop.permute.xlu0 %548
        %550 = vrot.lane.b32.xlu0 %v359, 112
        %v551 = vpop.permute.xlu0 %550
        %v616 = vmax.f32 %v296, %v425
        %v617 = vmax.f32 %v297, %v427
        %v618 = vmax.f32 %v298, %v429
        %v619 = vmax.f32 %v299, %v431
        %v620 = vmax.f32 %v300, %v433
        %v621 = vmax.f32 %v301, %v435
        %v622 = vmax.f32 %v302, %v437
        %v623 = vmax.f32 %v303, %v439
        %v624 = vmax.f32 %v304, %v441
        %v625 = vmax.f32 %v305, %v443
        %v626 = vmax.f32 %v306, %v445
        %v627 = vmax.f32 %v307, %v447
        %v628 = vmax.f32 %v308, %v449
        %v629 = vmax.f32 %v309, %v451
        %v630 = vmax.f32 %v310, %v453
        %v631 = vmax.f32 %v311, %v455
        %v632 = vmax.f32 %v312, %v457
        %v633 = vmax.f32 %v313, %v459
        %v634 = vmax.f32 %v314, %v461
        %v635 = vmax.f32 %v315, %v463
        %v636 = vmax.f32 %v316, %v465
        %v637 = vmax.f32 %v317, %v467
        %v638 = vmax.f32 %v318, %v469
        %v639 = vmax.f32 %v319, %v471
        %v640 = vmax.f32 %v320, %v473
        %v641 = vmax.f32 %v321, %v475
        %v642 = vmax.f32 %v322, %v477
        %v643 = vmax.f32 %v323, %v479
        %v644 = vmax.f32 %v324, %v481
        %v645 = vmax.f32 %v325, %v483
        %v646 = vmax.f32 %v326, %v485
        %v647 = vmax.f32 %v327, %v487
        %v648 = vmax.f32 %v328, %v489
        %v649 = vmax.f32 %v329, %v491
        %v650 = vmax.f32 %v330, %v493
        %v651 = vmax.f32 %v331, %v495
        %v652 = vmax.f32 %v332, %v497
        %v653 = vmax.f32 %v333, %v499
        %v654 = vmax.f32 %v334, %v501
        %v655 = vmax.f32 %v335, %v503
        %v656 = vmax.f32 %v336, %v505
        %v657 = vmax.f32 %v337, %v507
        %v658 = vmax.f32 %v338, %v509
        %v659 = vmax.f32 %v339, %v511
        %v660 = vmax.f32 %v340, %v513
        %v661 = vmax.f32 %v341, %v515
        %v662 = vmax.f32 %v342, %v517
        %v663 = vmax.f32 %v343, %v519
        %v664 = vmax.f32 %v344, %v521
        %v665 = vmax.f32 %v345, %v523
        %v666 = vmax.f32 %v346, %v525
        %v667 = vmax.f32 %v347, %v527
        %v668 = vmax.f32 %v348, %v529
        %v669 = vmax.f32 %v349, %v531
        %v670 = vmax.f32 %v350, %v533
        %v671 = vmax.f32 %v351, %v535
        %v672 = vmax.f32 %v352, %v537
        %v673 = vmax.f32 %v353, %v539
        %v674 = vmax.f32 %v354, %v541
        %v675 = vmax.f32 %v355, %v543
        %v676 = vmax.f32 %v356, %v545
        %v677 = vmax.f32 %v357, %v547
        %v678 = vmax.f32 %v358, %v549
        %v679 = vmax.f32 %v359, %v551
        %v680 = vmax.f32 %v616, %v618
        %v681 = vmax.f32 %v617, %v619
        %v682 = vmax.f32 %v620, %v622
        %v683 = vmax.f32 %v621, %v623
        %v684 = vmax.f32 %v624, %v626
        %v685 = vmax.f32 %v625, %v627
        %v686 = vmax.f32 %v628, %v630
        %v687 = vmax.f32 %v629, %v631
        %v688 = vmax.f32 %v632, %v634
        %v689 = vmax.f32 %v633, %v635
        %v690 = vmax.f32 %v636, %v638
        %v691 = vmax.f32 %v637, %v639
        %v692 = vmax.f32 %v640, %v642
        %v693 = vmax.f32 %v641, %v643
        %v694 = vmax.f32 %v644, %v646
        %v695 = vmax.f32 %v645, %v647
        %v696 = vmax.f32 %v648, %v650
        %v697 = vmax.f32 %v649, %v651
        %v698 = vmax.f32 %v652, %v654
        %v699 = vmax.f32 %v653, %v655
        %v700 = vmax.f32 %v656, %v658
        %v701 = vmax.f32 %v657, %v659
        %v702 = vmax.f32 %v660, %v662
        %v703 = vmax.f32 %v661, %v663
        %v704 = vmax.f32 %v664, %v666
        %v705 = vmax.f32 %v665, %v667
        %v706 = vmax.f32 %v668, %v670
        %v707 = vmax.f32 %v669, %v671
        %v708 = vmax.f32 %v672, %v674
        %v709 = vmax.f32 %v673, %v675
        %v710 = vmax.f32 %v676, %v678
        %v711 = vmax.f32 %v677, %v679
        %v712 = vld [vmem:[%s293] sm:$0xff]
        %v713 = vld [vmem:[%s293 + $0x8] sm:$0xff]
        %v714 = vld [vmem:[%s293 + $0x10] sm:$0xff]
        %v715 = vld [vmem:[%s293 + $0x18] sm:$0xff]
        %v716 = vld [vmem:[%s293 + $0x20] sm:$0xff]
        %v717 = vld [vmem:[%s293 + $0x28] sm:$0xff]
        %v718 = vld [vmem:[%s293 + $0x30] sm:$0xff]
        %v719 = vld [vmem:[%s293 + $0x38] sm:$0xff]
        %v720 = vld [vmem:[%s293 + $0x40] sm:$0xff]
        %v721 = vld [vmem:[%s293 + $0x48] sm:$0xff]
        %v722 = vld [vmem:[%s293 + $0x50] sm:$0xff]
        %v723 = vld [vmem:[%s293 + $0x58] sm:$0xff]
        %v724 = vld [vmem:[%s293 + $0x60] sm:$0xff]
        %v725 = vld [vmem:[%s293 + $0x68] sm:$0xff]
        %v726 = vld [vmem:[%s293 + $0x70] sm:$0xff]
        %v727 = vld [vmem:[%s293 + $0x78] sm:$0xff]
        %v728 = vld [vmem:[%s293 + $0x80] sm:$0xff]
        %v729 = vld [vmem:[%s293 + $0x88] sm:$0xff]
        %v730 = vld [vmem:[%s293 + $0x90] sm:$0xff]
        %v731 = vld [vmem:[%s293 + $0x98] sm:$0xff]
        %v732 = vld [vmem:[%s293 + $0xa0] sm:$0xff]
        %v733 = vld [vmem:[%s293 + $0xa8] sm:$0xff]
        %v734 = vld [vmem:[%s293 + $0xb0] sm:$0xff]
        %v735 = vld [vmem:[%s293 + $0xb8] sm:$0xff]
        %v736 = vld [vmem:[%s293 + $0xc0] sm:$0xff]
        %v737 = vld [vmem:[%s293 + $0xc8] sm:$0xff]
        %v738 = vld [vmem:[%s293 + $0xd0] sm:$0xff]
        %v739 = vld [vmem:[%s293 + $0xd8] sm:$0xff]
        %v740 = vld [vmem:[%s293 + $0xe0] sm:$0xff]
        %v741 = vld [vmem:[%s293 + $0xe8] sm:$0xff]
        %v742 = vld [vmem:[%s293 + $0xf0] sm:$0xff]
        %v743 = vld [vmem:[%s293 + $0xf8] sm:$0xff]
        %v744 = vld [vmem:[%s2] sm:$0xff]
        %v745 = vld [vmem:[%s2 + $0x8] sm:$0xff]
        %v746 = vld [vmem:[%s3] sm:$0xff]
        %v747 = vld [vmem:[%s3 + $0x8] sm:$0xff]
        %v748 = vld [vmem:[%s3 + $0x10] sm:$0xff]
        %v749 = vld [vmem:[%s3 + $0x18] sm:$0xff]
        %vm750 = vcmask 261120
        %v752 = vsel %vm750, %v712, 0
        %v755 = vsel %vm750, %v713, 0
        %v758 = vsel %vm750, %v714, 0
        %v761 = vsel %vm750, %v715, 0
        %v764 = vsel %vm750, %v716, 0
        %v767 = vsel %vm750, %v717, 0
        %v770 = vsel %vm750, %v718, 0
        %v773 = vsel %vm750, %v719, 0
        %v776 = vsel %vm750, %v720, 0
        %v779 = vsel %vm750, %v721, 0
        %v782 = vsel %vm750, %v722, 0
        %v785 = vsel %vm750, %v723, 0
        %v788 = vsel %vm750, %v724, 0
        %v791 = vsel %vm750, %v725, 0
        %v794 = vsel %vm750, %v726, 0
        %v797 = vsel %vm750, %v727, 0
        %v800 = vsel %vm750, %v728, 0
        %v803 = vsel %vm750, %v729, 0
        %v806 = vsel %vm750, %v730, 0
        %v809 = vsel %vm750, %v731, 0
        %v812 = vsel %vm750, %v732, 0
        %v815 = vsel %vm750, %v733, 0
        %v818 = vsel %vm750, %v734, 0
        %v821 = vsel %vm750, %v735, 0
        %v824 = vsel %vm750, %v736, 0
        %v827 = vsel %vm750, %v737, 0
        %v830 = vsel %vm750, %v738, 0
        %v833 = vsel %vm750, %v739, 0
        %v836 = vsel %vm750, %v740, 0
        %v839 = vsel %vm750, %v741, 0
        %v842 = vsel %vm750, %v742, 0
        %v845 = vsel %vm750, %v743, 0
        %847 = vmatprep.subr.mxu0 0.0
        %848 = vmatpush1.msra.mxu0 %v746
        %849 = vmatprep.subr.mxu0 0.0
        %850 = vmatpush1.msra.mxu0 %v747
        %851 = vmatprep.subr.mxu0 0.0
        %852 = vmatpush1.msra.mxu0 %v748
        %853 = vmatprep.subr.mxu0 0.0
        %854 = vmatpush1.msra.mxu0 %v749
        %855 = vmatprep.subr.mxu0 0.0
        %856 = vmatpush1.msra.mxu0 0.0
        %857 = vmatprep.subr.mxu0 0.0
        %858 = vmatpush1.msra.mxu0 0.0
        %859 = vmatprep.subr.mxu0 0.0
        %860 = vmatpush1.msra.mxu0 0.0
        %861 = vmatprep.subr.mxu0 0.0
        %862 = vmatpush1.msra.mxu0 0.0
        %863 = vmatprep.subr.mxu0 0.0
        %864 = vmatpush1.msra.mxu0 0.0
        %865 = vmatprep.subr.mxu0 0.0
        %866 = vmatpush1.msra.mxu0 0.0
        %867 = vmatprep.subr.mxu0 0.0
        %868 = vmatpush1.msra.mxu0 0.0
        %869 = vmatprep.subr.mxu0 0.0
        %870 = vmatpush1.msra.mxu0 0.0
        %871 = vmatprep.subr.mxu0 0.0
        %872 = vmatpush1.msra.mxu0 0.0
        %873 = vmatprep.subr.mxu0 0.0
        %874 = vmatpush1.msra.mxu0 0.0
        %875 = vmatprep.subr.mxu0 0.0
        %876 = vmatpush1.msra.mxu0 0.0
        %877 = vmatprep.subr.mxu0 0.0
        %878 = vmatpush1.msra.mxu0 0.0
        %879 = vmatprep.subr.mxu0 0.0
        %880 = vmatpush1.msra.mxu0 0.0
        %881 = vmatprep.subr.mxu0 0.0
        %882 = vmatpush1.msra.mxu0 0.0
        %883 = vmatprep.subr.mxu0 0.0
        %884 = vmatpush1.msra.mxu0 0.0
        %885 = vmatprep.subr.mxu0 0.0
        %886 = vmatpush1.msra.mxu0 0.0
        %887 = vmatprep.subr.mxu0 0.0
        %888 = vmatpush1.msra.mxu0 0.0
        %889 = vmatprep.subr.mxu0 0.0
        %890 = vmatpush1.msra.mxu0 0.0
        %891 = vmatprep.subr.mxu0 0.0
        %892 = vmatpush1.msra.mxu0 0.0
        %893 = vmatprep.subr.mxu0 0.0
        %894 = vmatpush1.msra.mxu0 0.0
        %895 = vmatprep.subr.mxu0 0.0
        %896 = vmatpush1.msra.mxu0 0.0
        %897 = vmatprep.subr.mxu0 0.0
        %898 = vmatpush1.msra.mxu0 0.0
        %899 = vmatprep.subr.mxu0 0.0
        %900 = vmatpush1.msra.mxu0 0.0
        %901 = vmatprep.subr.mxu0 0.0
        %902 = vmatpush1.msra.mxu0 0.0
        %903 = vmatprep.subr.mxu0 0.0
        %904 = vmatpush1.msra.mxu0 0.0
        %905 = vmatprep.subr.mxu0 0.0
        %906 = vmatpush1.msra.mxu0 0.0
        %907 = vmatprep.subr.mxu0 0.0
        %908 = vmatpush1.msra.mxu0 0.0
        %909 = vmatprep.subr.mxu0 0.0
        %910 = vmatpush1.msra.mxu0 0.0
        %911 = vmatprep.mubr.f32.mxu0 0.0
        %912 = vmatmul.mubr.f32.gmra.mrb[0].mxu0 %v752
        %v913 = vpop.f32.mrb[0].mxu0
        %v914 = vadd.f32 0.0, %v913
        %v915 = vpop.f32.mrb[0].mxu0
        %916 = vmatprep.mubr.f32.mxu0 0.0
        %917 = vmatmul.mubr.f32.gmra.mrb[0].mxu0 %v755
        %v918 = vpop.f32.mrb[0].mxu0
        %v919 = vadd.f32 0.0, %v918
        %v920 = vpop.f32.mrb[0].mxu0
        %921 = vmatprep.mubr.f32.mxu0 0.0
        %922 = vmatmul.mubr.f32.gmra.mrb[0].mxu0 %v758
        %v923 = vpop.f32.mrb[0].mxu0
        %v924 = vadd.f32 0.0, %v923
        %v925 = vpop.f32.mrb[0].mxu0
        %926 = vmatprep.mubr.f32.mxu0 0.0
        %927 = vmatmul.mubr.f32.gmra.mrb[0].mxu0 %v761
        %v928 = vpop.f32.mrb[0].mxu0
        %v929 = vadd.f32 0.0, %v928
        %v930 = vpop.f32.mrb[0].mxu0
        %931 = vmatprep.mubr.f32.mxu0 0.0
        %932 = vmatmul.mubr.f32.gmra.mrb[0].mxu0 %v764
        %v933 = vpop.f32.mrb[0].mxu0
        %v934 = vadd.f32 0.0, %v933
        %v935 = vpop.f32.mrb[0].mxu0
        %936 = vmatprep.mubr.f32.mxu0 0.0
        %937 = vmatmul.mubr.f32.gmra.mrb[0].mxu0 %v767
        %v938 = vpop.f32.mrb[0].mxu0
        %v939 = vadd.f32 0.0, %v938
        %v940 = vpop.f32.mrb[0].mxu0
        %941 = vmatprep.mubr.f32.mxu0 0.0
        %942 = vmatmul.mubr.f32.gmra.mrb[0].mxu0 %v770
        %v943 = vpop.f32.mrb[0].mxu0
        %v944 = vadd.f32 0.0, %v943
        %v945 = vpop.f32.mrb[0].mxu0
        %946 = vmatprep.mubr.f32.mxu0 0.0
        %947 = vmatmul.mubr.f32.gmra.mrb[0].mxu0 %v773
        %v948 = vpop.f32.mrb[0].mxu0
        %v949 = vadd.f32 0.0, %v948
        %v950 = vpop.f32.mrb[0].mxu0
        %951 = vmatprep.mubr.f32.mxu0 0.0
        %952 = vmatmul.mubr.f32.gmra.mrb[0].mxu0 %v776
        %v953 = vpop.f32.mrb[0].mxu0
        %v954 = vadd.f32 0.0, %v953
        %v955 = vpop.f32.mrb[0].mxu0
        %956 = vmatprep.mubr.f32.mxu0 0.0
        %957 = vmatmul.mubr.f32.gmra.mrb[0].mxu0 %v779
        %v958 = vpop.f32.mrb[0].mxu0
        %v959 = vadd.f32 0.0, %v958
        %v960 = vpop.f32.mrb[0].mxu0
        %961 = vmatprep.mubr.f32.mxu0 0.0
        %962 = vmatmul.mubr.f32.gmra.mrb[0].mxu0 %v782
        %v963 = vpop.f32.mrb[0].mxu0
        %v964 = vadd.f32 0.0, %v963
        %v965 = vpop.f32.mrb[0].mxu0
        %966 = vmatprep.mubr.f32.mxu0 0.0
        %967 = vmatmul.mubr.f32.gmra.mrb[0].mxu0 %v785
        %v968 = vpop.f32.mrb[0].mxu0
        %v969 = vadd.f32 0.0, %v968
        %v970 = vpop.f32.mrb[0].mxu0
        %971 = vmatprep.mubr.f32.mxu0 0.0
        %972 = vmatmul.mubr.f32.gmra.mrb[0].mxu0 %v788
        %v973 = vpop.f32.mrb[0].mxu0
        %v974 = vadd.f32 0.0, %v973
        %v975 = vpop.f32.mrb[0].mxu0
        %976 = vmatprep.mubr.f32.mxu0 0.0
        %977 = vmatmul.mubr.f32.gmra.mrb[0].mxu0 %v791
        %v978 = vpop.f32.mrb[0].mxu0
        %v979 = vadd.f32 0.0, %v978
        %v980 = vpop.f32.mrb[0].mxu0
        %981 = vmatprep.mubr.f32.mxu0 0.0
        %982 = vmatmul.mubr.f32.gmra.mrb[0].mxu0 %v794
        %v983 = vpop.f32.mrb[0].mxu0
        %v984 = vadd.f32 0.0, %v983
        %v985 = vpop.f32.mrb[0].mxu0
        %986 = vmatprep.mubr.f32.mxu0 0.0
        %987 = vmatmul.mubr.f32.gmra.mrb[0].mxu0 %v797
        %v988 = vpop.f32.mrb[0].mxu0
        %v989 = vadd.f32 0.0, %v988
        %v990 = vpop.f32.mrb[0].mxu0
        %991 = vmatprep.mubr.f32.mxu0 0.0
        %992 = vmatmul.mubr.f32.gmra.mrb[0].mxu0 %v800
        %v993 = vpop.f32.mrb[0].mxu0
        %v994 = vadd.f32 0.0, %v993
        %v995 = vpop.f32.mrb[0].mxu0
        %996 = vmatprep.mubr.f32.mxu0 0.0
        %997 = vmatmul.mubr.f32.gmra.mrb[0].mxu0 %v803
        %v998 = vpop.f32.mrb[0].mxu0
        %v999 = vadd.f32 0.0, %v998
        %v1000 = vpop.f32.mrb[0].mxu0
        %1001 = vmatprep.mubr.f32.mxu0 0.0
        %1002 = vmatmul.mubr.f32.gmra.mrb[0].mxu0 %v806
        %v1003 = vpop.f32.mrb[0].mxu0
        %v1004 = vadd.f32 0.0, %v1003
        %v1005 = vpop.f32.mrb[0].mxu0
        %1006 = vmatprep.mubr.f32.mxu0 0.0
        %1007 = vmatmul.mubr.f32.gmra.mrb[0].mxu0 %v809
        %v1008 = vpop.f32.mrb[0].mxu0
        %v1009 = vadd.f32 0.0, %v1008
        %v1010 = vpop.f32.mrb[0].mxu0
        %1011 = vmatprep.mubr.f32.mxu0 0.0
        %1012 = vmatmul.mubr.f32.gmra.mrb[0].mxu0 %v812
        %v1013 = vpop.f32.mrb[0].mxu0
        %v1014 = vadd.f32 0.0, %v1013
        %v1015 = vpop.f32.mrb[0].mxu0
        %1016 = vmatprep.mubr.f32.mxu0 0.0
        %1017 = vmatmul.mubr.f32.gmra.mrb[0].mxu0 %v815
        %v1018 = vpop.f32.mrb[0].mxu0
        %v1019 = vadd.f32 0.0, %v1018
        %v1020 = vpop.f32.mrb[0].mxu0
        %1021 = vmatprep.mubr.f32.mxu0 0.0
        %1022 = vmatmul.mubr.f32.gmra.mrb[0].mxu0 %v818
        %v1023 = vpop.f32.mrb[0].mxu0
        %v1024 = vadd.f32 0.0, %v1023
        %v1025 = vpop.f32.mrb[0].mxu0
        %1026 = vmatprep.mubr.f32.mxu0 0.0
        %1027 = vmatmul.mubr.f32.gmra.mrb[0].mxu0 %v821
        %v1028 = vpop.f32.mrb[0].mxu0
        %v1029 = vadd.f32 0.0, %v1028
        %v1030 = vpop.f32.mrb[0].mxu0
        %1031 = vmatprep.mubr.f32.mxu0 0.0
        %1032 = vmatmul.mubr.f32.gmra.mrb[0].mxu0 %v824
        %v1033 = vpop.f32.mrb[0].mxu0
        %v1034 = vadd.f32 0.0, %v1033
        %v1035 = vpop.f32.mrb[0].mxu0
        %1036 = vmatprep.mubr.f32.mxu0 0.0
        %1037 = vmatmul.mubr.f32.gmra.mrb[0].mxu0 %v827
        %v1038 = vpop.f32.mrb[0].mxu0
        %v1039 = vadd.f32 0.0, %v1038
        %v1040 = vpop.f32.mrb[0].mxu0
        %1041 = vmatprep.mubr.f32.mxu0 0.0
        %1042 = vmatmul.mubr.f32.gmra.mrb[0].mxu0 %v830
        %v1043 = vpop.f32.mrb[0].mxu0
        %v1044 = vadd.f32 0.0, %v1043
        %v1045 = vpop.f32.mrb[0].mxu0
        %1046 = vmatprep.mubr.f32.mxu0 0.0
        %1047 = vmatmul.mubr.f32.gmra.mrb[0].mxu0 %v833
        %v1048 = vpop.f32.mrb[0].mxu0
        %v1049 = vadd.f32 0.0, %v1048
        %v1050 = vpop.f32.mrb[0].mxu0
        %1051 = vmatprep.mubr.f32.mxu0 0.0
        %1052 = vmatmul.mubr.f32.gmra.mrb[0].mxu0 %v836
        %v1053 = vpop.f32.mrb[0].mxu0
        %v1054 = vadd.f32 0.0, %v1053
        %v1055 = vpop.f32.mrb[0].mxu0
        %1056 = vmatprep.mubr.f32.mxu0 0.0
        %1057 = vmatmul.mubr.f32.gmra.mrb[0].mxu0 %v839
        %v1058 = vpop.f32.mrb[0].mxu0
        %v1059 = vadd.f32 0.0, %v1058
        %v1060 = vpop.f32.mrb[0].mxu0
        %1061 = vmatprep.mubr.f32.mxu0 0.0
        %1062 = vmatmul.mubr.f32.gmra.mrb[0].mxu0 %v842
        %v1063 = vpop.f32.mrb[0].mxu0
        %v1064 = vadd.f32 0.0, %v1063
        %v1065 = vpop.f32.mrb[0].mxu0
        %1066 = vmatprep.mubr.f32.mxu0 0.0
        %1067 = vmatmul.mubr.f32.gmra.mrb[0].mxu0 %v845
        %v1068 = vpop.f32.mrb[0].mxu0
        %v1069 = vadd.f32 0.0, %v1068
        %v1070 = vpop.f32.mrb[0].mxu0
        %1071 = vdwg.mxu0
        %vm1072 = vcmask 130048
        %v1074 = vsel %vm1072, %v680, 0
        %v1077 = vsel %vm1072, %v681, 0
        %v1080 = vsel %vm1072, %v682, 0
        %v1083 = vsel %vm1072, %v683, 0
        %v1086 = vsel %vm1072, %v684, 0
        %v1089 = vsel %vm1072, %v685, 0
        %v1092 = vsel %vm1072, %v686, 0
        %v1095 = vsel %vm1072, %v687, 0
        %v1098 = vsel %vm1072, %v688, 0
        %v1101 = vsel %vm1072, %v689, 0
        %v1104 = vsel %vm1072, %v690, 0
        %v1107 = vsel %vm1072, %v691, 0
        %v1110 = vsel %vm1072, %v692, 0
        %v1113 = vsel %vm1072, %v693, 0
        %v1116 = vsel %vm1072, %v694, 0
        %v1119 = vsel %vm1072, %v695, 0
        %v1122 = vsel %vm1072, %v696, 0
        %v1125 = vsel %vm1072, %v697, 0
        %v1128 = vsel %vm1072, %v698, 0
        %v1131 = vsel %vm1072, %v699, 0
        %v1134 = vsel %vm1072, %v700, 0
        %v1137 = vsel %vm1072, %v701, 0
        %v1140 = vsel %vm1072, %v702, 0
        %v1143 = vsel %vm1072, %v703, 0
        %v1146 = vsel %vm1072, %v704, 0
        %v1149 = vsel %vm1072, %v705, 0
        %v1152 = vsel %vm1072, %v706, 0
        %v1155 = vsel %vm1072, %v707, 0
        %v1158 = vsel %vm1072, %v708, 0
        %v1161 = vsel %vm1072, %v709, 0
        %v1164 = vsel %vm1072, %v710, 0
        %v1167 = vsel %vm1072, %v711, 0
        %1169 = vmatprep.subr.mxu0 0.0
        %1170 = vmatpush1.msra.mxu0 %v744
        %1171 = vmatprep.subr.mxu0 0.0
        %1172 = vmatpush1.msra.mxu0 %v745
        %1173 = vmatprep.subr.mxu0 0.0
        %1174 = vmatpush1.msra.mxu0 0.0
        %1175 = vmatprep.subr.mxu0 0.0
        %1176 = vmatpush1.msra.mxu0 0.0
        %1177 = vmatprep.subr.mxu0 0.0
        %1178 = vmatpush1.msra.mxu0 0.0
        %1179 = vmatprep.subr.mxu0 0.0
        %1180 = vmatpush1.msra.mxu0 0.0
        %1181 = vmatprep.subr.mxu0 0.0
        %1182 = vmatpush1.msra.mxu0 0.0
        %1183 = vmatprep.subr.mxu0 0.0
        %1184 = vmatpush1.msra.mxu0 0.0
        %1185 = vmatprep.subr.mxu0 0.0
        %1186 = vmatpush1.msra.mxu0 0.0
        %1187 = vmatprep.subr.mxu0 0.0
        %1188 = vmatpush1.msra.mxu0 0.0
        %1189 = vmatprep.subr.mxu0 0.0
        %1190 = vmatpush1.msra.mxu0 0.0
        %1191 = vmatprep.subr.mxu0 0.0
        %1192 = vmatpush1.msra.mxu0 0.0
        %1193 = vmatprep.subr.mxu0 0.0
        %1194 = vmatpush1.msra.mxu0 0.0
        %1195 = vmatprep.subr.mxu0 0.0
        %1196 = vmatpush1.msra.mxu0 0.0
        %1197 = vmatprep.subr.mxu0 0.0
        %1198 = vmatpush1.msra.mxu0 0.0
        %1199 = vmatprep.subr.mxu0 0.0
        %1200 = vmatpush1.msra.mxu0 0.0
        %1201 = vmatprep.subr.mxu0 0.0
        %1202 = vmatpush1.msra.mxu0 0.0
        %1203 = vmatprep.subr.mxu0 0.0
        %1204 = vmatpush1.msra.mxu0 0.0
        %1205 = vmatprep.subr.mxu0 0.0
        %1206 = vmatpush1.msra.mxu0 0.0
        %1207 = vmatprep.subr.mxu0 0.0
        %1208 = vmatpush1.msra.mxu0 0.0
        %1209 = vmatprep.subr.mxu0 0.0
        %1210 = vmatpush1.msra.mxu0 0.0
        %1211 = vmatprep.subr.mxu0 0.0
        %1212 = vmatpush1.msra.mxu0 0.0
        %1213 = vmatprep.subr.mxu0 0.0
        %1214 = vmatpush1.msra.mxu0 0.0
        %1215 = vmatprep.subr.mxu0 0.0
        %1216 = vmatpush1.msra.mxu0 0.0
        %1217 = vmatprep.subr.mxu0 0.0
        %1218 = vmatpush1.msra.mxu0 0.0
        %1219 = vmatprep.subr.mxu0 0.0
        %1220 = vmatpush1.msra.mxu0 0.0
        %1221 = vmatprep.subr.mxu0 0.0
        %1222 = vmatpush1.msra.mxu0 0.0
        %1223 = vmatprep.subr.mxu0 0.0
        %1224 = vmatpush1.msra.mxu0 0.0
        %1225 = vmatprep.subr.mxu0 0.0
        %1226 = vmatpush1.msra.mxu0 0.0
        %1227 = vmatprep.subr.mxu0 0.0
        %1228 = vmatpush1.msra.mxu0 0.0
        %1229 = vmatprep.subr.mxu0 0.0
        %1230 = vmatpush1.msra.mxu0 0.0
        %1231 = vmatprep.subr.mxu0 0.0
        %1232 = vmatpush1.msra.mxu0 0.0
        %1233 = vmatprep.mubr.f32.mxu0 0.0
        %1234 = vmatmul.mubr.f32.gmra.mrb[0].mxu0 %v1074
        %v1235 = vpop.f32.mrb[0].mxu0
        %v1236 = vadd.f32 %v914, %v1235
        %v1237 = vpop.f32.mrb[0].mxu0
        %1238 = vmatprep.mubr.f32.mxu0 0.0
        %1239 = vmatmul.mubr.f32.gmra.mrb[0].mxu0 %v1077
        %v1240 = vpop.f32.mrb[0].mxu0
        %v1241 = vadd.f32 %v919, %v1240
        %v1242 = vpop.f32.mrb[0].mxu0
        %1243 = vmatprep.mubr.f32.mxu0 0.0
        %1244 = vmatmul.mubr.f32.gmra.mrb[0].mxu0 %v1080
        %v1245 = vpop.f32.mrb[0].mxu0
        %v1246 = vadd.f32 %v924, %v1245
        %v1247 = vpop.f32.mrb[0].mxu0
        %1248 = vmatprep.mubr.f32.mxu0 0.0
        %1249 = vmatmul.mubr.f32.gmra.mrb[0].mxu0 %v1083
        %v1250 = vpop.f32.mrb[0].mxu0
        %v1251 = vadd.f32 %v929, %v1250
        %v1252 = vpop.f32.mrb[0].mxu0
        %1253 = vmatprep.mubr.f32.mxu0 0.0
        %1254 = vmatmul.mubr.f32.gmra.mrb[0].mxu0 %v1086
        %v1255 = vpop.f32.mrb[0].mxu0
        %v1256 = vadd.f32 %v934, %v1255
        %v1257 = vpop.f32.mrb[0].mxu0
        %1258 = vmatprep.mubr.f32.mxu0 0.0
        %1259 = vmatmul.mubr.f32.gmra.mrb[0].mxu0 %v1089
        %v1260 = vpop.f32.mrb[0].mxu0
        %v1261 = vadd.f32 %v939, %v1260
        %v1262 = vpop.f32.mrb[0].mxu0
        %1263 = vmatprep.mubr.f32.mxu0 0.0
        %1264 = vmatmul.mubr.f32.gmra.mrb[0].mxu0 %v1092
        %v1265 = vpop.f32.mrb[0].mxu0
        %v1266 = vadd.f32 %v944, %v1265
        %v1267 = vpop.f32.mrb[0].mxu0
        %1268 = vmatprep.mubr.f32.mxu0 0.0
        %1269 = vmatmul.mubr.f32.gmra.mrb[0].mxu0 %v1095
        %v1270 = vpop.f32.mrb[0].mxu0
        %v1271 = vadd.f32 %v949, %v1270
        %v1272 = vpop.f32.mrb[0].mxu0
        %1273 = vmatprep.mubr.f32.mxu0 0.0
        %1274 = vmatmul.mubr.f32.gmra.mrb[0].mxu0 %v1098
        %v1275 = vpop.f32.mrb[0].mxu0
        %v1276 = vadd.f32 %v954, %v1275
        %v1277 = vpop.f32.mrb[0].mxu0
        %1278 = vmatprep.mubr.f32.mxu0 0.0
        %1279 = vmatmul.mubr.f32.gmra.mrb[0].mxu0 %v1101
        %v1280 = vpop.f32.mrb[0].mxu0
        %v1281 = vadd.f32 %v959, %v1280
        %v1282 = vpop.f32.mrb[0].mxu0
        %1283 = vmatprep.mubr.f32.mxu0 0.0
        %1284 = vmatmul.mubr.f32.gmra.mrb[0].mxu0 %v1104
        %v1285 = vpop.f32.mrb[0].mxu0
        %v1286 = vadd.f32 %v964, %v1285
        %v1287 = vpop.f32.mrb[0].mxu0
        %1288 = vmatprep.mubr.f32.mxu0 0.0
        %1289 = vmatmul.mubr.f32.gmra.mrb[0].mxu0 %v1107
        %v1290 = vpop.f32.mrb[0].mxu0
        %v1291 = vadd.f32 %v969, %v1290
        %v1292 = vpop.f32.mrb[0].mxu0
        %1293 = vmatprep.mubr.f32.mxu0 0.0
        %1294 = vmatmul.mubr.f32.gmra.mrb[0].mxu0 %v1110
        %v1295 = vpop.f32.mrb[0].mxu0
        %v1296 = vadd.f32 %v974, %v1295
        %v1297 = vpop.f32.mrb[0].mxu0
        %1298 = vmatprep.mubr.f32.mxu0 0.0
        %1299 = vmatmul.mubr.f32.gmra.mrb[0].mxu0 %v1113
        %v1300 = vpop.f32.mrb[0].mxu0
        %v1301 = vadd.f32 %v979, %v1300
        %v1302 = vpop.f32.mrb[0].mxu0
        %1303 = vmatprep.mubr.f32.mxu0 0.0
        %1304 = vmatmul.mubr.f32.gmra.mrb[0].mxu0 %v1116
        %v1305 = vpop.f32.mrb[0].mxu0
        %v1306 = vadd.f32 %v984, %v1305
        %v1307 = vpop.f32.mrb[0].mxu0
        %1308 = vmatprep.mubr.f32.mxu0 0.0
        %1309 = vmatmul.mubr.f32.gmra.mrb[0].mxu0 %v1119
        %v1310 = vpop.f32.mrb[0].mxu0
        %v1311 = vadd.f32 %v989, %v1310
        %v1312 = vpop.f32.mrb[0].mxu0
        %1313 = vmatprep.mubr.f32.mxu0 0.0
        %1314 = vmatmul.mubr.f32.gmra.mrb[0].mxu0 %v1122
        %v1315 = vpop.f32.mrb[0].mxu0
        %v1316 = vadd.f32 %v994, %v1315
        %v1317 = vpop.f32.mrb[0].mxu0
        %1318 = vmatprep.mubr.f32.mxu0 0.0
        %1319 = vmatmul.mubr.f32.gmra.mrb[0].mxu0 %v1125
        %v1320 = vpop.f32.mrb[0].mxu0
        %v1321 = vadd.f32 %v999, %v1320
        %v1322 = vpop.f32.mrb[0].mxu0
        %1323 = vmatprep.mubr.f32.mxu0 0.0
        %1324 = vmatmul.mubr.f32.gmra.mrb[0].mxu0 %v1128
        %v1325 = vpop.f32.mrb[0].mxu0
        %v1326 = vadd.f32 %v1004, %v1325
        %v1327 = vpop.f32.mrb[0].mxu0
        %1328 = vmatprep.mubr.f32.mxu0 0.0
        %1329 = vmatmul.mubr.f32.gmra.mrb[0].mxu0 %v1131
        %v1330 = vpop.f32.mrb[0].mxu0
        %v1331 = vadd.f32 %v1009, %v1330
        %v1332 = vpop.f32.mrb[0].mxu0
        %1333 = vmatprep.mubr.f32.mxu0 0.0
        %1334 = vmatmul.mubr.f32.gmra.mrb[0].mxu0 %v1134
        %v1335 = vpop.f32.mrb[0].mxu0
        %v1336 = vadd.f32 %v1014, %v1335
        %v1337 = vpop.f32.mrb[0].mxu0
        %1338 = vmatprep.mubr.f32.mxu0 0.0
        %1339 = vmatmul.mubr.f32.gmra.mrb[0].mxu0 %v1137
        %v1340 = vpop.f32.mrb[0].mxu0
        %v1341 = vadd.f32 %v1019, %v1340
        %v1342 = vpop.f32.mrb[0].mxu0
        %1343 = vmatprep.mubr.f32.mxu0 0.0
        %1344 = vmatmul.mubr.f32.gmra.mrb[0].mxu0 %v1140
        %v1345 = vpop.f32.mrb[0].mxu0
        %v1346 = vadd.f32 %v1024, %v1345
        %v1347 = vpop.f32.mrb[0].mxu0
        %1348 = vmatprep.mubr.f32.mxu0 0.0
        %1349 = vmatmul.mubr.f32.gmra.mrb[0].mxu0 %v1143
        %v1350 = vpop.f32.mrb[0].mxu0
        %v1351 = vadd.f32 %v1029, %v1350
        %v1352 = vpop.f32.mrb[0].mxu0
        %1353 = vmatprep.mubr.f32.mxu0 0.0
        %1354 = vmatmul.mubr.f32.gmra.mrb[0].mxu0 %v1146
        %v1355 = vpop.f32.mrb[0].mxu0
        %v1356 = vadd.f32 %v1034, %v1355
        %v1357 = vpop.f32.mrb[0].mxu0
        %1358 = vmatprep.mubr.f32.mxu0 0.0
        %1359 = vmatmul.mubr.f32.gmra.mrb[0].mxu0 %v1149
        %v1360 = vpop.f32.mrb[0].mxu0
        %v1361 = vadd.f32 %v1039, %v1360
        %v1362 = vpop.f32.mrb[0].mxu0
        %1363 = vmatprep.mubr.f32.mxu0 0.0
        %1364 = vmatmul.mubr.f32.gmra.mrb[0].mxu0 %v1152
        %v1365 = vpop.f32.mrb[0].mxu0
        %v1366 = vadd.f32 %v1044, %v1365
        %v1367 = vpop.f32.mrb[0].mxu0
        %1368 = vmatprep.mubr.f32.mxu0 0.0
        %1369 = vmatmul.mubr.f32.gmra.mrb[0].mxu0 %v1155
        %v1370 = vpop.f32.mrb[0].mxu0
        %v1371 = vadd.f32 %v1049, %v1370
        %v1372 = vpop.f32.mrb[0].mxu0
        %1373 = vmatprep.mubr.f32.mxu0 0.0
        %1374 = vmatmul.mubr.f32.gmra.mrb[0].mxu0 %v1158
        %v1375 = vpop.f32.mrb[0].mxu0
        %v1376 = vadd.f32 %v1054, %v1375
        %v1377 = vpop.f32.mrb[0].mxu0
        %1378 = vmatprep.mubr.f32.mxu0 0.0
        %1379 = vmatmul.mubr.f32.gmra.mrb[0].mxu0 %v1161
        %v1380 = vpop.f32.mrb[0].mxu0
        %v1381 = vadd.f32 %v1059, %v1380
        %v1382 = vpop.f32.mrb[0].mxu0
        %1383 = vmatprep.mubr.f32.mxu0 0.0
        %1384 = vmatmul.mubr.f32.gmra.mrb[0].mxu0 %v1164
        %v1385 = vpop.f32.mrb[0].mxu0
        %v1386 = vadd.f32 %v1064, %v1385
        %v1387 = vpop.f32.mrb[0].mxu0
        %1388 = vmatprep.mubr.f32.mxu0 0.0
        %1389 = vmatmul.mubr.f32.gmra.mrb[0].mxu0 %v1167
        %v1390 = vpop.f32.mrb[0].mxu0
        %v1391 = vadd.f32 %v1069, %v1390
        %v1392 = vpop.f32.mrb[0].mxu0
        %1393 = vdwg.mxu0
        %v1394 = vld [vmem:[%s4] sm:$0x1]
        %v1396 = vlaneseq
        %v1397 = vshrl.u32 %v1396, 7
        %v1398 = vsub.s32 0, %v1397
        %v1399 = vrot.slane %v1394, %v1398
        %v1401 = vadd.f32 %v1236, %v1399
        %v1402 = vadd.f32 %v1241, %v1399
        %v1403 = vadd.f32 %v1246, %v1399
        %v1404 = vadd.f32 %v1251, %v1399
        %v1405 = vadd.f32 %v1256, %v1399
        %v1406 = vadd.f32 %v1261, %v1399
        %v1407 = vadd.f32 %v1266, %v1399
        %v1408 = vadd.f32 %v1271, %v1399
        %v1409 = vadd.f32 %v1276, %v1399
        %v1410 = vadd.f32 %v1281, %v1399
        %v1411 = vadd.f32 %v1286, %v1399
        %v1412 = vadd.f32 %v1291, %v1399
        %v1413 = vadd.f32 %v1296, %v1399
        %v1414 = vadd.f32 %v1301, %v1399
        %v1415 = vadd.f32 %v1306, %v1399
        %v1416 = vadd.f32 %v1311, %v1399
        %v1417 = vadd.f32 %v1316, %v1399
        %v1418 = vadd.f32 %v1321, %v1399
        %v1419 = vadd.f32 %v1326, %v1399
        %v1420 = vadd.f32 %v1331, %v1399
        %v1421 = vadd.f32 %v1336, %v1399
        %v1422 = vadd.f32 %v1341, %v1399
        %v1423 = vadd.f32 %v1346, %v1399
        %v1424 = vadd.f32 %v1351, %v1399
        %v1425 = vadd.f32 %v1356, %v1399
        %v1426 = vadd.f32 %v1361, %v1399
        %v1427 = vadd.f32 %v1366, %v1399
        %v1428 = vadd.f32 %v1371, %v1399
        %v1429 = vadd.f32 %v1376, %v1399
        %v1430 = vadd.f32 %v1381, %v1399
        %v1431 = vadd.f32 %v1386, %v1399
        %v1432 = vadd.f32 %v1391, %v1399
        %v1433 = vmax.f32 %v1401, 0.0
        %v1434 = vmax.f32 %v1402, 0.0
        %v1435 = vmax.f32 %v1403, 0.0
        %v1436 = vmax.f32 %v1404, 0.0
        %v1437 = vmax.f32 %v1405, 0.0
        %v1438 = vmax.f32 %v1406, 0.0
        %v1439 = vmax.f32 %v1407, 0.0
        %v1440 = vmax.f32 %v1408, 0.0
        %v1441 = vmax.f32 %v1409, 0.0
        %v1442 = vmax.f32 %v1410, 0.0
        %v1443 = vmax.f32 %v1411, 0.0
        %v1444 = vmax.f32 %v1412, 0.0
        %v1445 = vmax.f32 %v1413, 0.0
        %v1446 = vmax.f32 %v1414, 0.0
        %v1447 = vmax.f32 %v1415, 0.0
        %v1448 = vmax.f32 %v1416, 0.0
        %v1449 = vmax.f32 %v1417, 0.0
        %v1450 = vmax.f32 %v1418, 0.0
        %v1451 = vmax.f32 %v1419, 0.0
        %v1452 = vmax.f32 %v1420, 0.0
        %v1453 = vmax.f32 %v1421, 0.0
        %v1454 = vmax.f32 %v1422, 0.0
        %v1455 = vmax.f32 %v1423, 0.0
        %v1456 = vmax.f32 %v1424, 0.0
        %v1457 = vmax.f32 %v1425, 0.0
        %v1458 = vmax.f32 %v1426, 0.0
        %v1459 = vmax.f32 %v1427, 0.0
        %v1460 = vmax.f32 %v1428, 0.0
        %v1461 = vmax.f32 %v1429, 0.0
        %v1462 = vmax.f32 %v1430, 0.0
        %v1463 = vmax.f32 %v1431, 0.0
        %v1464 = vmax.f32 %v1432, 0.0
        %1465 = vst.msk [vmem:[%s272] sm:$0xff] %vm750, %v1433
        %1466 = vst.msk [vmem:[%s272 + $0x8] sm:$0xff] %vm750, %v1434
        %1467 = vst.msk [vmem:[%s272 + $0x10] sm:$0xff] %vm750, %v1435
        %1468 = vst.msk [vmem:[%s272 + $0x18] sm:$0xff] %vm750, %v1436
        %1469 = vst.msk [vmem:[%s272 + $0x20] sm:$0xff] %vm750, %v1437
        %1470 = vst.msk [vmem:[%s272 + $0x28] sm:$0xff] %vm750, %v1438
        %1471 = vst.msk [vmem:[%s272 + $0x30] sm:$0xff] %vm750, %v1439
        %1472 = vst.msk [vmem:[%s272 + $0x38] sm:$0xff] %vm750, %v1440
        %1473 = vst.msk [vmem:[%s272 + $0x40] sm:$0xff] %vm750, %v1441
        %1474 = vst.msk [vmem:[%s272 + $0x48] sm:$0xff] %vm750, %v1442
        %1475 = vst.msk [vmem:[%s272 + $0x50] sm:$0xff] %vm750, %v1443
        %1476 = vst.msk [vmem:[%s272 + $0x58] sm:$0xff] %vm750, %v1444
        %1477 = vst.msk [vmem:[%s272 + $0x60] sm:$0xff] %vm750, %v1445
        %1478 = vst.msk [vmem:[%s272 + $0x68] sm:$0xff] %vm750, %v1446
        %1479 = vst.msk [vmem:[%s272 + $0x70] sm:$0xff] %vm750, %v1447
        %1480 = vst.msk [vmem:[%s272 + $0x78] sm:$0xff] %vm750, %v1448
        %1481 = vst.msk [vmem:[%s272 + $0x80] sm:$0xff] %vm750, %v1449
        %1482 = vst.msk [vmem:[%s272 + $0x88] sm:$0xff] %vm750, %v1450
        %1483 = vst.msk [vmem:[%s272 + $0x90] sm:$0xff] %vm750, %v1451
        %1484 = vst.msk [vmem:[%s272 + $0x98] sm:$0xff] %vm750, %v1452
        %1485 = vst.msk [vmem:[%s272 + $0xa0] sm:$0xff] %vm750, %v1453
        %1486 = vst.msk [vmem:[%s272 + $0xa8] sm:$0xff] %vm750, %v1454
        %1487 = vst.msk [vmem:[%s272 + $0xb0] sm:$0xff] %vm750, %v1455
        %1488 = vst.msk [vmem:[%s272 + $0xb8] sm:$0xff] %vm750, %v1456
        %1489 = vst.msk [vmem:[%s272 + $0xc0] sm:$0xff] %vm750, %v1457
        %1490 = vst.msk [vmem:[%s272 + $0xc8] sm:$0xff] %vm750, %v1458
        %1491 = vst.msk [vmem:[%s272 + $0xd0] sm:$0xff] %vm750, %v1459
        %1492 = vst.msk [vmem:[%s272 + $0xd8] sm:$0xff] %vm750, %v1460
        %1493 = vst.msk [vmem:[%s272 + $0xe0] sm:$0xff] %vm750, %v1461
        %1494 = vst.msk [vmem:[%s272 + $0xe8] sm:$0xff] %vm750, %v1462
        %1495 = vst.msk [vmem:[%s272 + $0xf0] sm:$0xff] %vm750, %v1463
        %1496 = vst.msk [vmem:[%s272 + $0xf8] sm:$0xff] %vm750, %v1464
        %s1497 = sand.u32 %s160, 1
        %s1498 = scalar_lea.sflag [#allocation3], %s1497
        %s1499 = sand.u32 %s160, 1
        %s1500 = smul.addr %s1499, 256
        %s1501 = scalar_lea.vmem [#allocation2], %s1500
        // Predicated region
        $region41: #{decoder_forward.1} parent=39 // pred_check
          %p1502 = pneg %p170
        $region42: #{decoder_forward.1} parent=39 // pred_check_branch
          %1504 = sbr.rel (%p1502) target = $region44
        $region43: #{decoder_forward.1} parent=39 // pred_region
          %s1505 = smul.u32 16, %s24
          %s1507 = ssub.s32 4096, 4096
          %1508 = vsyncadd %s1498, %s1507
          %s1509 = smul.addr %s1505, 2
          %s1510 = smul.addr %s23, 32
          %s1511 = sadd.s32 %s1509, %s1510
          %s1512 = smul.addr %s1511, 128
          %s1513 = scalar_lea.hbm %s5, %s1512
          %s1514 = sshll.u32 %s1501, 4
          %s1515 = int_to_ptr.vmem [resolvable:$true] %s1514
          %1520 = dma.vmem_to_hbm [thread:$0]  %s1515, 4096, %s1513, %s1498, 128, 128, 8
        $region44: #{decoder_forward.1} parent=39 // pred_fallthru
          _
      $region40: #{decoder_forward.1} parent=5 // pred_fallthru
        _
      %p1521 = scmp.le.s32.totalorder 2, %s14
      // Predicated region
      $region45: #{decoder_forward.1} parent=5 // pred_check
        %p1522 = pneg %p1521
      $region46: #{decoder_forward.1} parent=5 // pred_check_branch
        %1524 = sbr.rel (%p1522) target = $region48
      $region47: #{decoder_forward.1} parent=5 // pred_region
        %s1525 = ssub.s32 %s14, 2
        // Predicated region
        $region49: #{decoder_forward.1} parent=47 // pred_check
          %p1526 = pneg %p176
        $region50: #{decoder_forward.1} parent=47 // pred_check_branch
          %1528 = sbr.rel (%p1526) target = $region52
        $region51: #{decoder_forward.1} parent=47 // pred_region
          %s1529 = sand.u32 %s161, 1
          %s1530 = scalar_lea.sflag [#allocation3], %s1529
          %s1531 = sand.u32 %s161, 1
          %s1532 = smul.addr %s1531, 256
          %s1533 = scalar_lea.vmem [#allocation2], %s1532
          %1534 = dma.done %s1530, 4096
        $region52: #{decoder_forward.1} parent=47 // pred_fallthru
          _
      $region48: #{decoder_forward.1} parent=5 // pred_fallthru
        _
    $region6: #{decoder_forward.1} parent=1 // loop_footer
      %s18 = sadd.s32 1, %s14
    $region7: #{decoder_forward.1} parent=1 // loop_footer_branch
      %13 = sbr.rel target = $region3
    $region8: #{decoder_forward.1} parent=1 // loop_exit
      _
    %1535 = vsyncpa [#allocation3], 1
    %s1536 = scalar_lea.sflag [#allocation3], 1
    %1537 = vsyncpa %s1536, 1

</llo_original>
